<compile_context>
chip_gen: v7x
topology: tpu7x:2x2x1
jax: 0.10.0
libtpu: 0.0.40
codegen_flags: <defaults>
</compile_context>

<pallas_src>
import jax
import jax.numpy as jnp
from jax.experimental import pallas as pl
from jax.experimental.pallas import tpu as pltpu

_BN_EPS = 1e-5
_LANE = 128     # pad feature (lane) dims to multiples of this
_TK = 512       # fc1 contraction tile (in_channels); keeps each w1 buffer <= 4 MiB bf16


def _round_up(n, m):
    return ((n + m - 1) // m) * m


def _pad_to(a, shape):
    pads = [(0, t - s) for s, t in zip(a.shape, shape)]
    if all(p == (0, 0) for p in pads):
        return a
    return jnp.pad(a, pads)


def _neck_kernel(x_ref, w1_ref, b1_ref, gamma_ref, beta_ref, w2_ref, b2_ref,
                 o_ref, acc_ref):
    """Grid axis 0 tiles the fc1 contraction (in_channels).

    acc_ref: (N, hid_p) f32 scratch accumulating pooled @ w1.  On the last K step:
    + b1, BatchNorm1d (training-mode batch stats), ReLU, fc2, + b2, store.
    """
    k = pl.program_id(0)

    @pl.when(k == 0)
    def _():
        acc_ref[...] = jnp.zeros_like(acc_ref)

    # fc1 partial product on the MXU: bf16 inputs, f32 accumulate.
    acc_ref[...] += jnp.dot(x_ref[...], w1_ref[...],
                            preferred_element_type=jnp.float32)

    @pl.when(k == pl.num_programs(0) - 1)
    def _():
        h = acc_ref[...] + b1_ref[...]
        # BatchNorm1d, training mode: batch mean / biased batch var, eps=1e-5.
        # TODO(synk): no path for eval-mode running statistics (running_mean/var).
        mean = jnp.mean(h, axis=0, keepdims=True)
        centered = h - mean
        var = jnp.mean(centered * centered, axis=0, keepdims=True)
        scale = gamma_ref[...] * jax.lax.rsqrt(var + _BN_EPS)
        h = centered * scale + beta_ref[...]
        h = jnp.maximum(h, 0.0)
        # fc2 on the MXU (bf16 inputs, f32 accumulate).
        out = jnp.dot(h.astype(w2_ref.dtype), w2_ref[...],
                      preferred_element_type=jnp.float32)
        o_ref[...] = (out + b2_ref[...]).astype(o_ref.dtype)


def nonlinear_neck_v2(x_nchw, params, with_avg_pool=True):
    """x_nchw: (N, C, H, W).  Returns [ (N, out_channels) f32 ]."""
    N = x_nchw.shape[0]
    # Pool / flatten in the wrapper (XLA reduce) — kernel only sees (N, K).
    if with_avg_pool:
        feats = jnp.mean(x_nchw, axis=(2, 3))            # (N, C)
    else:
        feats = x_nchw.reshape(N, -1)                    # (N, C*H*W), lane-dense 2-D

    w1, b1, gamma, beta, w2, b2 = (
        params["w1"], params["b1"], params["gamma"], params["beta"],
        params["w2"], params["b2"])
    K, hid = w1.shape
    n_out = w2.shape[1]
    assert feats.shape[1] == K, "feature size mismatch with w1"

    # Lane-align feature dims; zero padding is exact and sliced off at the end.
    hid_p = _round_up(hid, _LANE)
    out_p = _round_up(n_out, _LANE)
    tk = K if K <= _TK else _TK
    k_p = _round_up(K, tk)
    nk = k_p // tk

    # bf16 for MXU inputs; biases / BN params stay f32.
    feats_p = _pad_to(feats, (N, k_p)).astype(jnp.bfloat16)
    w1_p = _pad_to(w1, (k_p, hid_p)).astype(jnp.bfloat16)
    w2_p = _pad_to(w2, (hid_p, out_p)).astype(jnp.bfloat16)
    b1_p = _pad_to(b1.reshape(1, hid), (1, hid_p)).astype(jnp.float32)
    gamma_p = _pad_to(gamma.reshape(1, hid), (1, hid_p)).astype(jnp.float32)
    beta_p = _pad_to(beta.reshape(1, hid), (1, hid_p)).astype(jnp.float32)
    b2_p = _pad_to(b2.reshape(1, n_out), (1, out_p)).astype(jnp.float32)

    grid_spec = pltpu.PrefetchScalarGridSpec(
        num_scalar_prefetch=0,
        grid=(nk,),
        in_specs=[
            pl.BlockSpec((N, tk), lambda k: (0, k)),         # pooled feats tile
            pl.BlockSpec((tk, hid_p), lambda k: (k, 0)),     # w1 tile
            pl.BlockSpec((1, hid_p), lambda k: (0, 0)),      # b1
            pl.BlockSpec((1, hid_p), lambda k: (0, 0)),      # gamma
            pl.BlockSpec((1, hid_p), lambda k: (0, 0)),      # beta
            pl.BlockSpec((hid_p, out_p), lambda k: (0, 0)),  # w2 (resident across K)
            pl.BlockSpec((1, out_p), lambda k: (0, 0)),      # b2
        ],
        out_specs=pl.BlockSpec((N, out_p), lambda k: (0, 0)),
        scratch_shapes=[pltpu.VMEM((N, hid_p), jnp.float32)],
    )

    out_padded = pl.pallas_call(
        _neck_kernel,
        out_shape=jax.ShapeDtypeStruct((N, out_p), jnp.float32),
        grid_spec=grid_spec,
        compiler_params=pltpu.CompilerParams(
            dimension_semantics=("arbitrary",),   # K is a reduction axis
            vmem_limit_bytes=64 << 20),
    )(feats_p, w1_p, b1_p, gamma_p, beta_p, w2_p, b2_p)

    return [out_padded[:, :n_out]]


def init_params(key, in_channels, hid_channels, out_channels, std=0.01):
    """Matches _init_weights(init_linear='normal', std=0.01, bias=0); BN gamma=1, beta=0.
    Linear weights are stored (in_features, out_features) in bf16 (MXU dtype)."""
    k1, k2 = jax.random.split(key)
    w1 = (jax.random.normal(k1, (in_channels, hid_channels), jnp.float32) * std
          ).astype(jnp.bfloat16)
    w2 = (jax.random.normal(k2, (hid_channels, out_channels), jnp.float32) * std
          ).astype(jnp.bfloat16)
    return {
        "w1": w1,
        "b1": jnp.zeros((hid_channels,), jnp.float32),
        "gamma": jnp.ones((hid_channels,), jnp.float32),
        "beta": jnp.zeros((hid_channels,), jnp.float32),
        "w2": w2,
        "b2": jnp.zeros((out_channels,), jnp.float32),
    }


def _reference(x_nchw, params, with_avg_pool=True):
    """Pure-JAX reference with the same bf16 matmul / f32 accumulate numerics."""
    N = x_nchw.shape[0]
    if with_avg_pool:
        feats = jnp.mean(x_nchw, axis=(2, 3))
    else:
        feats = x_nchw.reshape(N, -1)
    h = jnp.dot(feats.astype(jnp.bfloat16), params["w1"].astype(jnp.bfloat16),
                preferred_element_type=jnp.float32) + params["b1"][None, :]
    mean = jnp.mean(h, axis=0, keepdims=True)
    centered = h - mean
    var = jnp.mean(centered * centered, axis=0, keepdims=True)
    h = centered * (params["gamma"][None, :] * jax.lax.rsqrt(var + _BN_EPS)) \
        + params["beta"][None, :]
    h = jnp.maximum(h, 0.0)
    return (jnp.dot(h.astype(jnp.bfloat16), params["w2"].astype(jnp.bfloat16),
                    preferred_element_type=jnp.float32) + params["b2"][None, :])


if __name__ == "__main__":
    key = jax.random.PRNGKey(0)
    kx, kp = jax.random.split(key)

    N, C, H, W = 2, 4, 16, 16
    hid_channels, out_channels = 32, 16

    x = jax.random.normal(kx, (N, C, H, W), jnp.float32)
    params = init_params(kp, C, hid_channels, out_channels)

    out = nonlinear_neck_v2(x, params)[0]
    out = jax.block_until_ready(out)

    ref = _reference(x, params)
    assert out.shape == (N, out_channels)
    assert jnp.allclose(out, ref, atol=1e-4, rtol=1e-4), "mismatch vs reference"
    print("KERNEL_OK")
</pallas_src>

<mosaic_0001>
module attributes {stable_mosaic.version = 11 : i64} {
  func.func @_neck_kernel(%arg0: i32, %arg1: memref<2x4xbf16, #tpu.memory_space<vmem>>, %arg2: memref<4x128xbf16, #tpu.memory_space<vmem>>, %arg3: memref<1x128xf32, #tpu.memory_space<vmem>>, %arg4: memref<1x128xf32, #tpu.memory_space<vmem>>, %arg5: memref<1x128xf32, #tpu.memory_space<vmem>>, %arg6: memref<128x128xbf16, #tpu.memory_space<vmem>>, %arg7: memref<1x128xf32, #tpu.memory_space<vmem>>, %arg8: memref<2x128xf32, #tpu.memory_space<vmem>>, %arg9: memref<2x128xf32, #tpu.memory_space<vmem>>) attributes {dimension_semantics = [#tpu.dimension_semantics<arbitrary>], iteration_bounds = array<i64: 1>, scalar_prefetch = 0 : i64, scratch_operands = 1 : i64, tpu.core_type = #tpu.core_type<tc>, window_params = [{transform_indices = @transform_0, window_bounds = array<i64: 2, 4>}, {transform_indices = @transform_1, window_bounds = array<i64: 4, 128>}, {pipeline_mode = #tpu.pipeline_mode<synchronous>, transform_indices = @transform_2, window_bounds = array<i64: 1, 128>}, {pipeline_mode = #tpu.pipeline_mode<synchronous>, transform_indices = @transform_3, window_bounds = array<i64: 1, 128>}, {pipeline_mode = #tpu.pipeline_mode<synchronous>, transform_indices = @transform_4, window_bounds = array<i64: 1, 128>}, {pipeline_mode = #tpu.pipeline_mode<synchronous>, transform_indices = @transform_5, window_bounds = array<i64: 128, 128>}, {pipeline_mode = #tpu.pipeline_mode<synchronous>, transform_indices = @transform_6, window_bounds = array<i64: 1, 128>}, {pipeline_mode = #tpu.pipeline_mode<synchronous>, transform_indices = @transform_7, window_bounds = array<i64: 2, 128>}]} {
    %c0_i32 = arith.constant 0 : i32
    %0 = arith.cmpi eq, %arg0, %c0_i32 : i32
    %1 = arith.extui %0 : i1 to i32
    %c0_i32_0 = arith.constant 0 : i32
    %2 = arith.cmpi ne, %1, %c0_i32_0 : i32
    scf.if %2 {
      %cst_10 = arith.constant 0.000000e+00 : f32
      %12 = vector.broadcast %cst_10 : f32 to vector<2x128xf32>
      %c0_11 = arith.constant 0 : index
      %c0_12 = arith.constant 0 : index
      %13 = vector.load %arg9[%c0_11, %c0_12] : memref<2x128xf32, #tpu.memory_space<vmem>>, vector<2x128xf32>
      tpu.vector_store %arg9[%c0_11, %c0_12], %12 {strides = array<i32>} : memref<2x128xf32, #tpu.memory_space<vmem>>, vector<2x128xf32>,
    } else {
    }
    %c0 = arith.constant 0 : index
    %c0_1 = arith.constant 0 : index
    %3 = vector.load %arg9[%c0, %c0_1] : memref<2x128xf32, #tpu.memory_space<vmem>>, vector<2x128xf32>
    %c0_2 = arith.constant 0 : index
    %c0_3 = arith.constant 0 : index
    %4 = vector.load %arg1[%c0_2, %c0_3] : memref<2x4xbf16, #tpu.memory_space<vmem>>, vector<2x4xbf16>
    %c0_4 = arith.constant 0 : index
    %c0_5 = arith.constant 0 : index
    %5 = vector.load %arg2[%c0_4, %c0_5] : memref<4x128xbf16, #tpu.memory_space<vmem>>, vector<4x128xbf16>
    %cst = arith.constant dense<0.000000e+00> : vector<2x128xf32>
    %6 = tpu.matmul %4, %5, %cst {dimension_numbers = #tpu.dot_dimension_numbers<[1], [0], [0], [1], [0, 0, 1, 1], [], []>} : vector<2x4xbf16>, vector<4x128xbf16>, vector<2x128xf32> -> vector<2x128xf32>
    %7 = arith.addf %3, %6 : vector<2x128xf32>
    %c0_6 = arith.constant 0 : index
    %c0_7 = arith.constant 0 : index
    %8 = vector.load %arg9[%c0_6, %c0_7] : memref<2x128xf32, #tpu.memory_space<vmem>>, vector<2x128xf32>
    tpu.vector_store %arg9[%c0_6, %c0_7], %7 {strides = array<i32>} : memref<2x128xf32, #tpu.memory_space<vmem>>, vector<2x128xf32>,
    %c0_i32_8 = arith.constant 0 : i32
    %9 = arith.cmpi eq, %arg0, %c0_i32_8 : i32
    %10 = arith.extui %9 : i1 to i32
    %c0_i32_9 = arith.constant 0 : i32
    %11 = arith.cmpi ne, %10, %c0_i32_9 : i32
    scf.if %11 {
      %c0_10 = arith.constant 0 : index
      %c0_11 = arith.constant 0 : index
      %12 = vector.load %arg9[%c0_10, %c0_11] : memref<2x128xf32, #tpu.memory_space<vmem>>, vector<2x128xf32>
      %c0_12 = arith.constant 0 : index
      %c0_13 = arith.constant 0 : index
      %13 = vector.load %arg3[%c0_12, %c0_13] : memref<1x128xf32, #tpu.memory_space<vmem>>, vector<1x128xf32>
      %14 = vector.broadcast %13 : vector<1x128xf32> to vector<2x128xf32>
      %15 = arith.addf %12, %14 : vector<2x128xf32>
      %cst_14 = arith.constant dense<0.000000e+00> : vector<128xf32>
      %16 = vector.multi_reduction <add>, %15, %cst_14 [0] : vector<2x128xf32> to vector<128xf32>
      %17 = vector.shape_cast %16 : vector<128xf32> to vector<1x128xf32>
      %cst_15 = arith.constant 2.000000e+00 : f32
      %18 = vector.broadcast %cst_15 : f32 to vector<1x128xf32>
      %19 = arith.divf %17, %18 : vector<1x128xf32>
      %20 = vector.broadcast %19 : vector<1x128xf32> to vector<2x128xf32>
      %21 = arith.subf %15, %20 : vector<2x128xf32>
      %22 = arith.mulf %21, %21 : vector<2x128xf32>
      %cst_16 = arith.constant dense<0.000000e+00> : vector<128xf32>
      %23 = vector.multi_reduction <add>, %22, %cst_16 [0] : vector<2x128xf32> to vector<128xf32>
      %24 = vector.shape_cast %23 : vector<128xf32> to vector<1x128xf32>
      %cst_17 = arith.constant 2.000000e+00 : f32
      %25 = vector.broadcast %cst_17 : f32 to vector<1x128xf32>
      %26 = arith.divf %24, %25 : vector<1x128xf32>
      %c0_18 = arith.constant 0 : index
      %c0_19 = arith.constant 0 : index
      %27 = vector.load %arg4[%c0_18, %c0_19] : memref<1x128xf32, #tpu.memory_space<vmem>>, vector<1x128xf32>
      %cst_20 = arith.constant 9.99999974E-6 : f32
      %28 = vector.broadcast %cst_20 : f32 to vector<1x128xf32>
      %29 = arith.addf %26, %28 : vector<1x128xf32>
      %30 = math.rsqrt %29 : vector<1x128xf32>
      %31 = arith.mulf %27, %30 : vector<1x128xf32>
      %32 = vector.broadcast %31 : vector<1x128xf32> to vector<2x128xf32>
      %33 = arith.mulf %21, %32 : vector<2x128xf32>
      %c0_21 = arith.constant 0 : index
      %c0_22 = arith.constant 0 : index
      %34 = vector.load %arg5[%c0_21, %c0_22] : memref<1x128xf32, #tpu.memory_space<vmem>>, vector<1x128xf32>
      %35 = vector.broadcast %34 : vector<1x128xf32> to vector<2x128xf32>
      %36 = arith.addf %33, %35 : vector<2x128xf32>
      %cst_23 = arith.constant 0.000000e+00 : f32
      %37 = vector.broadcast %cst_23 : f32 to vector<2x128xf32>
      %38 = arith.maximumf %36, %37 : vector<2x128xf32>
      %39 = arith.truncf %38 : vector<2x128xf32> to vector<2x128xbf16>
      %c0_24 = arith.constant 0 : index
      %c0_25 = arith.constant 0 : index
      %40 = vector.load %arg6[%c0_24, %c0_25] : memref<128x128xbf16, #tpu.memory_space<vmem>>, vector<128x128xbf16>
      %cst_26 = arith.constant dense<0.000000e+00> : vector<2x128xf32>
      %41 = tpu.matmul %39, %40, %cst_26 {dimension_numbers = #tpu.dot_dimension_numbers<[1], [0], [0], [1], [0, 0, 1, 1], [], []>} : vector<2x128xbf16>, vector<128x128xbf16>, vector<2x128xf32> -> vector<2x128xf32>
      %c0_27 = arith.constant 0 : index
      %c0_28 = arith.constant 0 : index
      %42 = vector.load %arg7[%c0_27, %c0_28] : memref<1x128xf32, #tpu.memory_space<vmem>>, vector<1x128xf32>
      %43 = vector.broadcast %42 : vector<1x128xf32> to vector<2x128xf32>
      %44 = arith.addf %41, %43 : vector<2x128xf32>
      %c0_29 = arith.constant 0 : index
      %c0_30 = arith.constant 0 : index
      %45 = vector.load %arg8[%c0_29, %c0_30] : memref<2x128xf32, #tpu.memory_space<vmem>>, vector<2x128xf32>
      tpu.vector_store %arg8[%c0_29, %c0_30], %44 {strides = array<i32>} : memref<2x128xf32, #tpu.memory_space<vmem>>, vector<2x128xf32>,
    } else {
    }
    return
  }
  func.func @transform_0(%arg0: i32) -> (i32, i32) {
    %c0_i32 = arith.constant 0 : i32
    %c0_i32_0 = arith.constant 0 : i32
    return %c0_i32, %arg0 : i32, i32
  }
  func.func @transform_1(%arg0: i32) -> (i32, i32) {
    %c0_i32 = arith.constant 0 : i32
    %c0_i32_0 = arith.constant 0 : i32
    return %arg0, %c0_i32 : i32, i32
  }
  func.func @transform_2(%arg0: i32) -> (i32, i32) {
    %c0_i32 = arith.constant 0 : i32
    %c0_i32_0 = arith.constant 0 : i32
    %c0_i32_1 = arith.constant 0 : i32
    return %c0_i32, %c0_i32_0 : i32, i32
  }
  func.func @transform_3(%arg0: i32) -> (i32, i32) {
    %c0_i32 = arith.constant 0 : i32
    %c0_i32_0 = arith.constant 0 : i32
    %c0_i32_1 = arith.constant 0 : i32
    return %c0_i32, %c0_i32_0 : i32, i32
  }
  func.func @transform_4(%arg0: i32) -> (i32, i32) {
    %c0_i32 = arith.constant 0 : i32
    %c0_i32_0 = arith.constant 0 : i32
    %c0_i32_1 = arith.constant 0 : i32
    return %c0_i32, %c0_i32_0 : i32, i32
  }
  func.func @transform_5(%arg0: i32) -> (i32, i32) {
    %c0_i32 = arith.constant 0 : i32
    %c0_i32_0 = arith.constant 0 : i32
    %c0_i32_1 = arith.constant 0 : i32
    return %c0_i32, %c0_i32_0 : i32, i32
  }
  func.func @transform_6(%arg0: i32) -> (i32, i32) {
    %c0_i32 = arith.constant 0 : i32
    %c0_i32_0 = arith.constant 0 : i32
    %c0_i32_1 = arith.constant 0 : i32
    return %c0_i32, %c0_i32_0 : i32, i32
  }
  func.func @transform_7(%arg0: i32) -> (i32, i32) {
    %c0_i32 = arith.constant 0 : i32
    %c0_i32_0 = arith.constant 0 : i32
    %c0_i32_1 = arith.constant 0 : i32
    return %c0_i32, %c0_i32_0 : i32, i32
  }
}

</mosaic_0001>

<llo_original>
// kernel: tpu_custom_call.1
$region0: #{tpu_custom_call.1}
  #allocation0 [shape = 'u32[]', space=smem, size = 0x4, offset = 0x4, fixed_abs, tag = 'smem constant byte address 0x4 - core index']
  #allocation1 [shape = 'u32[144,128]{1,0:T(1,128)}', space=vmem, size = 0x12000, scoped, tag = 'internal scratch']
  #allocation2 [shape = 'f32[2,128]{1,0:T(2,128)}', space=vmem, size = 0x400, scoped, tag = 'scratch operand']
  %s0 = inlined_call_operand.hbm [shape: bf16[2,4], index: 0, kind: input, shape index: {}]
  %s1 = inlined_call_operand.hbm [shape: bf16[4,128], index: 1, kind: input, shape index: {}]
  %s2 = inlined_call_operand.hbm [shape: f32[1,128], index: 2, kind: input, shape index: {}]
  %s3 = inlined_call_operand.hbm [shape: f32[1,128], index: 3, kind: input, shape index: {}]
  %s4 = inlined_call_operand.hbm [shape: f32[1,128], index: 4, kind: input, shape index: {}]
  %s5 = inlined_call_operand.hbm [shape: bf16[128,128], index: 5, kind: input, shape index: {}]
  %s6 = inlined_call_operand.hbm [shape: f32[1,128], index: 6, kind: input, shape index: {}]
  %s7 = inlined_call_operand.hbm [shape: f32[2,128], index: 7, kind: output, shape index: {}]
  %s8 = sld [smem:[#allocation0]]
  $region74: #{tpu_custom_call.1} parent=0
    _
  %s10 = ssub.s32 1, %s8
  %s11 = scalar_select 0, %s10, %s8
  $region1: #{tpu_custom_call.1} parent=0
    #allocation3 [shape = 'u8[512]{0}', space=vmem, size = 0x400, scoped, tag = 'input window, operand 0, single buffered']
    #allocation4 [shape = 's32[1]{0}', space=sflag, size = 0x4, scoped, tag = 'scoped memory for tpu_custom_call.1']
    #allocation5 [shape = 's32[1]{0}', space=sflag, size = 0x4, scoped, tag = 'scoped memory for tpu_custom_call.1']
    #allocation6 [shape = 'u8[1024]{0}', space=vmem, size = 0x400, scoped, tag = 'input window, operand 1, single buffered']
    #allocation7 [shape = 's32[1]{0}', space=sflag, size = 0x4, scoped, tag = 'scoped memory for tpu_custom_call.1']
    #allocation8 [shape = 'u8[512]{0}', space=vmem, size = 0x400, scoped, tag = 'input window, operand 2, single buffered']
    #allocation9 [shape = 'u8[512]{0}', space=vmem, size = 0x400, scoped, tag = 'input window, operand 3, single buffered']
    #allocation10 [shape = 's32[1]{0}', space=sflag, size = 0x4, scoped, tag = 'scoped memory for tpu_custom_call.1']
    #allocation11 [shape = 'u8[512]{0}', space=vmem, size = 0x400, scoped, tag = 'input window, operand 4, single buffered']
    #allocation12 [shape = 'u8[32768]{0}', space=vmem, size = 0x8000, scoped, tag = 'input window, operand 5, single buffered']
    #allocation13 [shape = 's32[1]{0}', space=sflag, size = 0x4, scoped, tag = 'scoped memory for tpu_custom_call.1']
    #allocation14 [shape = 'u8[512]{0}', space=vmem, size = 0x400, scoped, tag = 'input window, operand 6, single buffered']
    #allocation15 [shape = 'u8[1024]{0}', space=vmem, size = 0x400, scoped, tag = 'output window, operand 0, single buffered']
    %12 = vsyncpa [#allocation4], 0
    %13 = vsyncpa [#allocation7], 0
    %14 = vsyncpa [#allocation10], 0
    %15 = vsyncpa [#allocation13], 0
    %16 = vsyncpa [#allocation5], 0
    // Predicated region
    $region2: #{tpu_custom_call.1} parent=1 // pred_check
      _
    $region3: #{tpu_custom_call.1} parent=1 // pred_check_branch
      %18 = sbr.rel (0) target = $region5
    $region4: #{tpu_custom_call.1} parent=1 // pred_region
      %s20 = ssub.s32 16, 16
      %21 = vsyncadd [#allocation4], %s20
      %s23 = sshll.u32 [#allocation3], 4
      %s24 = int_to_ptr.vmem [resolvable:$true] %s23
      %26 = dma.hbm_to_vmem [thread:$0]  %s0, 16, %s24, [#allocation4]
    $region5: #{tpu_custom_call.1} parent=1 // pred_fallthru
      _
    // Predicated region
    $region6: #{tpu_custom_call.1} parent=1 // pred_check
      _
    $region7: #{tpu_custom_call.1} parent=1 // pred_check_branch
      %28 = sbr.rel (0) target = $region9
    $region8: #{tpu_custom_call.1} parent=1 // pred_region
      %s30 = ssub.s32 32, 32
      %31 = vsyncadd [#allocation7], %s30
      %s33 = sshll.u32 [#allocation6], 4
      %s34 = int_to_ptr.vmem [resolvable:$true] %s33
      %36 = dma.hbm_to_vmem [thread:$0]  %s1, 32, %s34, [#allocation7]
    $region9: #{tpu_custom_call.1} parent=1 // pred_fallthru
      _
    // Predicated region
    $region10: #{tpu_custom_call.1} parent=1 // pred_check
      _
    $region11: #{tpu_custom_call.1} parent=1 // pred_check_branch
      %38 = sbr.rel (0) target = $region13
    $region12: #{tpu_custom_call.1} parent=1 // pred_region
      %s40 = ssub.s32 16, 16
      %41 = vsyncadd [#allocation7], %s40
      %s43 = sshll.u32 [#allocation8], 4
      %s44 = int_to_ptr.vmem [resolvable:$true] %s43
      %46 = dma.hbm_to_vmem [thread:$0]  %s2, 16, %s44, [#allocation7]
    $region13: #{tpu_custom_call.1} parent=1 // pred_fallthru
      _
    // Predicated region
    $region14: #{tpu_custom_call.1} parent=1 // pred_check
      _
    $region15: #{tpu_custom_call.1} parent=1 // pred_check_branch
      %48 = sbr.rel (0) target = $region17
    $region16: #{tpu_custom_call.1} parent=1 // pred_region
      %s50 = ssub.s32 16, 16
      %51 = vsyncadd [#allocation10], %s50
      %s53 = sshll.u32 [#allocation9], 4
      %s54 = int_to_ptr.vmem [resolvable:$true] %s53
      %56 = dma.hbm_to_vmem [thread:$0]  %s3, 16, %s54, [#allocation10]
    $region17: #{tpu_custom_call.1} parent=1 // pred_fallthru
      _
    // Predicated region
    $region18: #{tpu_custom_call.1} parent=1 // pred_check
      _
    $region19: #{tpu_custom_call.1} parent=1 // pred_check_branch
      %58 = sbr.rel (0) target = $region21
    $region20: #{tpu_custom_call.1} parent=1 // pred_region
      %s60 = ssub.s32 16, 16
      %61 = vsyncadd [#allocation10], %s60
      %s63 = sshll.u32 [#allocation11], 4
      %s64 = int_to_ptr.vmem [resolvable:$true] %s63
      %66 = dma.hbm_to_vmem [thread:$0]  %s4, 16, %s64, [#allocation10]
    $region21: #{tpu_custom_call.1} parent=1 // pred_fallthru
      _
    // Predicated region
    $region22: #{tpu_custom_call.1} parent=1 // pred_check
      _
    $region23: #{tpu_custom_call.1} parent=1 // pred_check_branch
      %68 = sbr.rel (0) target = $region25
    $region24: #{tpu_custom_call.1} parent=1 // pred_region
      %s70 = ssub.s32 1024, 1024
      %71 = vsyncadd [#allocation13], %s70
      %s72 = sshll.u32 [#allocation12], 4
      %s73 = int_to_ptr.vmem [resolvable:$true] %s72
      %78 = dma.hbm_to_vmem [thread:$0]  %s5, 1024, %s73, [#allocation13], 64, 64, 4
    $region25: #{tpu_custom_call.1} parent=1 // pred_fallthru
      _
    // Predicated region
    $region26: #{tpu_custom_call.1} parent=1 // pred_check
      _
    $region27: #{tpu_custom_call.1} parent=1 // pred_check_branch
      %80 = sbr.rel (0) target = $region29
    $region28: #{tpu_custom_call.1} parent=1 // pred_region
      %s82 = ssub.s32 16, 16
      %83 = vsyncadd [#allocation13], %s82
      %s85 = sshll.u32 [#allocation14], 4
      %s86 = int_to_ptr.vmem [resolvable:$true] %s85
      %88 = dma.hbm_to_vmem [thread:$0]  %s6, 16, %s86, [#allocation13]
    $region29: #{tpu_custom_call.1} parent=1 // pred_fallthru
      _
    // Predicated region
    $region30: #{tpu_custom_call.1} parent=1 // pred_check
      _
    $region31: #{tpu_custom_call.1} parent=1 // pred_check_branch
      %90 = sbr.rel (0) target = $region33
    $region32: #{tpu_custom_call.1} parent=1 // pred_region
      %91 = dma.done [#allocation4], 16
    $region33: #{tpu_custom_call.1} parent=1 // pred_fallthru
      _
    // Predicated region
    $region34: #{tpu_custom_call.1} parent=1 // pred_check
      _
    $region35: #{tpu_custom_call.1} parent=1 // pred_check_branch
      %93 = sbr.rel (0) target = $region37
    $region36: #{tpu_custom_call.1} parent=1 // pred_region
      %94 = dma.done [#allocation7], 32
    $region37: #{tpu_custom_call.1} parent=1 // pred_fallthru
      _
    // Predicated region
    $region38: #{tpu_custom_call.1} parent=1 // pred_check
      _
    $region39: #{tpu_custom_call.1} parent=1 // pred_check_branch
      %96 = sbr.rel (0) target = $region41
    $region40: #{tpu_custom_call.1} parent=1 // pred_region
      %97 = dma.done [#allocation7], 16
    $region41: #{tpu_custom_call.1} parent=1 // pred_fallthru
      _
    // Predicated region
    $region42: #{tpu_custom_call.1} parent=1 // pred_check
      _
    $region43: #{tpu_custom_call.1} parent=1 // pred_check_branch
      %99 = sbr.rel (0) target = $region45
    $region44: #{tpu_custom_call.1} parent=1 // pred_region
      %100 = dma.done [#allocation10], 16
    $region45: #{tpu_custom_call.1} parent=1 // pred_fallthru
      _
    // Predicated region
    $region46: #{tpu_custom_call.1} parent=1 // pred_check
      _
    $region47: #{tpu_custom_call.1} parent=1 // pred_check_branch
      %102 = sbr.rel (0) target = $region49
    $region48: #{tpu_custom_call.1} parent=1 // pred_region
      %103 = dma.done [#allocation10], 16
    $region49: #{tpu_custom_call.1} parent=1 // pred_fallthru
      _
    // Predicated region
    $region50: #{tpu_custom_call.1} parent=1 // pred_check
      _
    $region51: #{tpu_custom_call.1} parent=1 // pred_check_branch
      %105 = sbr.rel (0) target = $region53
    $region52: #{tpu_custom_call.1} parent=1 // pred_region
      %106 = dma.done [#allocation13], 1024
    $region53: #{tpu_custom_call.1} parent=1 // pred_fallthru
      _
    // Predicated region
    $region54: #{tpu_custom_call.1} parent=1 // pred_check
      _
    $region55: #{tpu_custom_call.1} parent=1 // pred_check_branch
      %108 = sbr.rel (0) target = $region57
    $region56: #{tpu_custom_call.1} parent=1 // pred_region
      %109 = dma.done [#allocation13], 16
    $region57: #{tpu_custom_call.1} parent=1 // pred_fallthru
      _
    %p111 = scmp.eq.s32.totalorder 0, 0
    // Predicated region
    $region58: #{tpu_custom_call.1} parent=1 // pred_check
      %p112 = pneg %p111
    $region59: #{tpu_custom_call.1} parent=1 // pred_check_branch
      %114 = sbr.rel (%p112) target = $region61
    $region60: #{tpu_custom_call.1} parent=1 // pred_region
      %115 = vst [vmem:[#allocation2] sm:$0x3] 0.0
    $region61: #{tpu_custom_call.1} parent=1 // pred_fallthru
      _
    %v116 = vld [vmem:[#allocation2] sm:$0x3]
    %v117 = vld [vmem:[#allocation3] sm:$0x1]
    %v118 = vld [vmem:[#allocation6] sm:$0x3]
    %vm119 = vcmask 31744
    %v121 = vsel %vm119, %v117, 0
    %vm123 = vcmask 1041408
    %v125 = vsel %vm123, %v118, 0
    %127 = vmatprep.subr.bf16.mxu0 0
    %128 = vmatpush1.bf16.msra.mxu0 %v125
    %129 = vmatprep.subr.bf16.mxu0 0
    %130 = vmatpush1.bf16.msra.mxu0 0
    %131 = vmatprep.subr.bf16.mxu0 0
    %132 = vmatpush1.bf16.msra.mxu0 0
    %133 = vmatprep.subr.bf16.mxu0 0
    %134 = vmatpush1.bf16.msra.mxu0 0
    %135 = vmatprep.subr.bf16.mxu0 0
    %136 = vmatpush1.bf16.msra.mxu0 0
    %137 = vmatprep.subr.bf16.mxu0 0
    %138 = vmatpush1.bf16.msra.mxu0 0
    %139 = vmatprep.subr.bf16.mxu0 0
    %140 = vmatpush1.bf16.msra.mxu0 0
    %141 = vmatprep.subr.bf16.mxu0 0
    %142 = vmatpush1.bf16.msra.mxu0 0
    %143 = vmatprep.subr.bf16.mxu0 0
    %144 = vmatpush1.bf16.msra.mxu0 0
    %145 = vmatprep.subr.bf16.mxu0 0
    %146 = vmatpush1.bf16.msra.mxu0 0
    %147 = vmatprep.subr.bf16.mxu0 0
    %148 = vmatpush1.bf16.msra.mxu0 0
    %149 = vmatprep.subr.bf16.mxu0 0
    %150 = vmatpush1.bf16.msra.mxu0 0
    %151 = vmatprep.subr.bf16.mxu0 0
    %152 = vmatpush1.bf16.msra.mxu0 0
    %153 = vmatprep.subr.bf16.mxu0 0
    %154 = vmatpush1.bf16.msra.mxu0 0
    %155 = vmatprep.subr.bf16.mxu0 0
    %156 = vmatpush1.bf16.msra.mxu0 0
    %157 = vmatprep.subr.bf16.mxu0 0
    %158 = vmatpush1.bf16.msra.mxu0 0
    %159 = vmatprep.mubr.bf16.mxu0 0
    %160 = vmatmul.mubr.bf16.gmra.mrb[0].mxu0 %v121
    %v161 = vpop.f32.mrb[0].mxu0
    %v162 = vadd.f32 0.0, %v161
    %v163 = vpop.f32.mrb[0].mxu0
    %v164 = vpop.f32.mrb[0].mxu0
    %v165 = vpop.f32.mrb[0].mxu0
    %166 = vdwg.mxu0
    %v167 = vadd.f32 %v116, %v162
    %168 = vst [vmem:[#allocation2] sm:$0x3] %v167
    // Predicated region
    $region62: #{tpu_custom_call.1} parent=1 // pred_check
      %p169 = pneg %p111
    $region63: #{tpu_custom_call.1} parent=1 // pred_check_branch
      %171 = sbr.rel (%p169) target = $region65
    $region64: #{tpu_custom_call.1} parent=1 // pred_region
      %v172 = vld [vmem:[#allocation2] sm:$0x3]
      %v173 = vld [vmem:[#allocation8] sm:$0x1]
      %v175 = vlaneseq
      %v176 = vshrl.u32 %v175, 7
      %v177 = vsub.s32 0, %v176
      %v178 = vrot.slane %v173, %v177
      %v180 = vadd.f32 %v172, %v178
      %v181 = vsel %vm123, %v180, 0.0
      %v182 = vrot.slane %v181, 4
      %v183 = vadd.f32 %v181, %v182
      %v184 = vrot.slane %v183, 2
      %v185 = vadd.f32 %v183, %v184
      %v186 = vrot.slane %v185, 1
      %v187 = vadd.f32 %v185, %v186
      %v188 = vrcp.pop 2.0
      %v189 = vmul.f32 %v187, %v188
      %v190 = vsub.f32 %v180, %v189
      %v191 = vmul.f32 %v190, %v190
      %v192 = vsel %vm123, %v191, 0.0
      %v193 = vrot.slane %v192, 4
      %v194 = vadd.f32 %v192, %v193
      %v195 = vrot.slane %v194, 2
      %v196 = vadd.f32 %v194, %v195
      %v197 = vrot.slane %v196, 1
      %v198 = vadd.f32 %v196, %v197
      %v199 = vmul.f32 %v198, %v188
      %v200 = vld [vmem:[#allocation9] sm:$0x1]
      %v201 = vadd.f32 %v199, 1e-05
      %v202 = vrsqrt.pop %v201
      %v203 = vmul.f32 %v200, %v202
      %v205 = vlaneseq
      %v206 = vshrl.u32 %v205, 7
      %v207 = vsub.s32 0, %v206
      %v208 = vrot.slane %v203, %v207
      %v210 = vmul.f32 %v190, %v208
      %v211 = vld [vmem:[#allocation11] sm:$0x1]
      %v213 = vlaneseq
      %v214 = vshrl.u32 %v213, 7
      %v215 = vsub.s32 0, %v214
      %v216 = vrot.slane %v211, %v215
      %v218 = vadd.f32 %v210, %v216
      %v219 = vmax.f32 %v218, 0.0
      %v220 = vpack.c.bf16 %v219, %v219
      %v221 = vld [vmem:[#allocation12] sm:$0xf]
      %v222 = vld [vmem:[#allocation12 + $0x4] sm:$0xf]
      %v223 = vld [vmem:[#allocation12 + $0x8] sm:$0xf]
      %v224 = vld [vmem:[#allocation12 + $0xc] sm:$0xf]
      %v225 = vld [vmem:[#allocation12 + $0x10] sm:$0xf]
      %v226 = vld [vmem:[#allocation12 + $0x14] sm:$0xf]
      %v227 = vld [vmem:[#allocation12 + $0x18] sm:$0xf]
      %v228 = vld [vmem:[#allocation12 + $0x1c] sm:$0xf]
      %v229 = vld [vmem:[#allocation12 + $0x20] sm:$0xf]
      %v230 = vld [vmem:[#allocation12 + $0x24] sm:$0xf]
      %v231 = vld [vmem:[#allocation12 + $0x28] sm:$0xf]
      %v232 = vld [vmem:[#allocation12 + $0x2c] sm:$0xf]
      %v233 = vld [vmem:[#allocation12 + $0x30] sm:$0xf]
      %v234 = vld [vmem:[#allocation12 + $0x34] sm:$0xf]
      %v235 = vld [vmem:[#allocation12 + $0x38] sm:$0xf]
      %v236 = vld [vmem:[#allocation12 + $0x3c] sm:$0xf]
      %v237 = vld [vmem:[#allocation14] sm:$0x1]
      %v239 = vlaneseq
      %v240 = vshrl.u32 %v239, 7
      %v241 = vsub.s32 0, %v240
      %v242 = vrot.slane %v237, %v241
      %v260 = vunpack.c.l.b16 %v221
      %v261 = vunpack.c.l.b16 %v222
      %v262 = vunpack.c.l.b16 %v223
      %v263 = vunpack.c.l.b16 %v224
      %v264 = vunpack.c.l.b16 %v225
      %v265 = vunpack.c.l.b16 %v226
      %v266 = vunpack.c.l.b16 %v227
      %v267 = vunpack.c.l.b16 %v228
      %v268 = vunpack.c.l.b16 %v229
      %v269 = vunpack.c.l.b16 %v230
      %v270 = vunpack.c.l.b16 %v231
      %v271 = vunpack.c.l.b16 %v232
      %v272 = vunpack.c.l.b16 %v233
      %v273 = vunpack.c.l.b16 %v234
      %v274 = vunpack.c.l.b16 %v235
      %v275 = vunpack.c.l.b16 %v236
      %v276 = vpack.c.b16 %v261, %v260
      %v277 = vpack.c.b16 %v263, %v262
      %v278 = vpack.c.b16 %v265, %v264
      %v279 = vpack.c.b16 %v267, %v266
      %v280 = vpack.c.b16 %v269, %v268
      %v281 = vpack.c.b16 %v271, %v270
      %v282 = vpack.c.b16 %v273, %v272
      %v283 = vpack.c.b16 %v275, %v274
      %292 = vmatprep.subr.bf16.mxu0 0
      %293 = vmatpush1.bf16.msra.mxu0 %v276
      %294 = vmatprep.subr.bf16.mxu0 0
      %295 = vmatpush1.bf16.msra.mxu0 %v277
      %296 = vmatprep.subr.bf16.mxu0 0
      %297 = vmatpush1.bf16.msra.mxu0 %v278
      %298 = vmatprep.subr.bf16.mxu0 0
      %299 = vmatpush1.bf16.msra.mxu0 %v279
      %300 = vmatprep.subr.bf16.mxu0 0
      %301 = vmatpush1.bf16.msra.mxu0 %v280
      %302 = vmatprep.subr.bf16.mxu0 0
      %303 = vmatpush1.bf16.msra.mxu0 %v281
      %304 = vmatprep.subr.bf16.mxu0 0
      %305 = vmatpush1.bf16.msra.mxu0 %v282
      %306 = vmatprep.subr.bf16.mxu0 0
      %307 = vmatpush1.bf16.msra.mxu0 %v283
      %308 = vmatprep.subr.bf16.mxu0 0
      %309 = vmatpush1.bf16.msra.mxu0 0
      %310 = vmatprep.subr.bf16.mxu0 0
      %311 = vmatpush1.bf16.msra.mxu0 0
      %312 = vmatprep.subr.bf16.mxu0 0
      %313 = vmatpush1.bf16.msra.mxu0 0
      %314 = vmatprep.subr.bf16.mxu0 0
      %315 = vmatpush1.bf16.msra.mxu0 0
      %316 = vmatprep.subr.bf16.mxu0 0
      %317 = vmatpush1.bf16.msra.mxu0 0
      %318 = vmatprep.subr.bf16.mxu0 0
      %319 = vmatpush1.bf16.msra.mxu0 0
      %320 = vmatprep.subr.bf16.mxu0 0
      %321 = vmatpush1.bf16.msra.mxu0 0
      %322 = vmatprep.subr.bf16.mxu0 0
      %323 = vmatpush1.bf16.msra.mxu0 0
      %324 = vmatprep.mubr.bf16.mxu0 0
      %325 = vmatmul.mubr.bf16.gmra.mrb[0].mxu0 %v220
      %v326 = vpop.f32.mrb[0].mxu0
      %v327 = vadd.f32 %v242, %v326
      %v328 = vpop.f32.mrb[0].mxu0
      %v329 = vpop.f32.mrb[0].mxu0
      %v330 = vpop.f32.mrb[0].mxu0
      %331 = vdwg.mxu0
      %332 = vst [vmem:[#allocation15] sm:$0x3] %v327
    $region65: #{tpu_custom_call.1} parent=1 // pred_fallthru
      _
    // Predicated region
    $region66: #{tpu_custom_call.1} parent=1 // pred_check
      _
    $region67: #{tpu_custom_call.1} parent=1 // pred_check_branch
      %334 = sbr.rel (0) target = $region69
    $region68: #{tpu_custom_call.1} parent=1 // pred_region
      %s336 = ssub.s32 32, 32
      %337 = vsyncadd [#allocation5], %s336
      %s339 = sshll.u32 [#allocation15], 4
      %s340 = int_to_ptr.vmem [resolvable:$true] %s339
      %342 = dma.vmem_to_hbm [thread:$0]  %s340, 32, %s7, [#allocation5]
    $region69: #{tpu_custom_call.1} parent=1 // pred_fallthru
      _
    // Predicated region
    $region70: #{tpu_custom_call.1} parent=1 // pred_check
      _
    $region71: #{tpu_custom_call.1} parent=1 // pred_check_branch
      %344 = sbr.rel (0) target = $region73
    $region72: #{tpu_custom_call.1} parent=1 // pred_region
      %345 = dma.done [#allocation5], 32
    $region73: #{tpu_custom_call.1} parent=1 // pred_fallthru
      _
    %346 = vsyncpa [#allocation4], 1
    %347 = vsyncpa [#allocation7], 1
    %348 = vsyncpa [#allocation10], 1
    %349 = vsyncpa [#allocation13], 1
    %350 = vsyncpa [#allocation5], 1

</llo_original>
